<compile_context>
chip_gen: v5e
topology: v5e:2x2
jax: 0.10.0
libtpu: 0.0.40
codegen_flags: <defaults>
</compile_context>

<pallas_src>
import jax
import jax.numpy as jnp
from jax.experimental import pallas as pl
from jax.experimental.pallas import tpu as pltpu


def discriminator_kernel(xt_ref, w1_ref, w2_ref, w3_ref, w4_ref, b123_ref,
                         b4_ref, o_ref):
    # xt:   (2, TB)  input, batch on lanes
    # w1:   (H, 2)   PyTorch (out, in) layout
    # w2/3: (H, H)
    # w4:   (1, H)
    # b123: (H, 3)   columns = b1 | b2 | b3
    # b4:   (1, 1)   scalar in SMEM
    # o:    (1, TB)  lane-dense output

    # ---- Layer 1: K=2 contraction -> two VPU broadcast FMAs (skip the MXU).
    x0 = xt_ref[0:1, :]                                   # (1, TB)
    x1 = xt_ref[1:2, :]                                   # (1, TB)
    h = w1_ref[:, 0:1] * x0 + w1_ref[:, 1:2] * x1 + b123_ref[:, 0:1]   # (H, TB)
    h = jnp.maximum(h, 0.0)

    # ---- Layers 2 & 3: MXU matmuls in transposed (hidden, batch) layout.
    h = jnp.dot(w2_ref[...], h, preferred_element_type=jnp.float32) + b123_ref[:, 1:2]
    h = jnp.maximum(h, 0.0)
    h = jnp.dot(w3_ref[...], h, preferred_element_type=jnp.float32) + b123_ref[:, 2:3]
    h = jnp.maximum(h, 0.0)

    # ---- Output layer + sigmoid.  sigmoid(z) = 0.5*(tanh(z/2)+1): the
    # transcendental goes to the EUP slot, no f32 divide on the VPU.
    logits = jnp.dot(w4_ref[...], h, preferred_element_type=jnp.float32) + b4_ref[0, 0]
    o_ref[...] = (0.5 * jnp.tanh(0.5 * logits) + 0.5).astype(o_ref.dtype)


def discriminator_toy_forward(x, params, *, tile_b=None):
    """x: (batch, 2) float32.  params: PyTorch-layout (out, in) weights + biases."""
    B, Fin = x.shape
    assert Fin == 2
    H = params["w1"].shape[0]

    # Default: the whole batch in one grid step.  For very large batches on
    # v7x, pass tile_b = B // 2 (must be a multiple of 128) so the "parallel"
    # grid axis shards across the two TensorCores.
    if tile_b is None:
        tile_b = B
    assert tile_b == B or (tile_b % 128 == 0 and B % tile_b == 0)
    num_tiles = B // tile_b

    # Transpose once in the wrapper so batch sits on the lane axis in-kernel.
    xt = x.T                                                 # (2, B)
    w1, w2, w3, w4 = params["w1"], params["w2"], params["w3"], params["w4"]
    b123 = jnp.stack([params["b1"], params["b2"], params["b3"]], axis=1)  # (H, 3)
    b4 = params["b4"].reshape(1, 1)                          # scalar -> SMEM

    flops = 2 * B * (Fin * H + H * H + H * H + H) + 5 * B * H
    bytes_accessed = 4 * (x.size + w1.size + w2.size + w3.size + w4.size
                          + b123.size + b4.size + B)

    out_t = pl.pallas_call(
        discriminator_kernel,
        out_shape=jax.ShapeDtypeStruct((1, B), jnp.float32),
        grid_spec=pltpu.PrefetchScalarGridSpec(
            num_scalar_prefetch=0,
            grid=(num_tiles,),
            in_specs=[
                pl.BlockSpec((Fin, tile_b), lambda i: (0, i)),   # x^T tile
                pl.BlockSpec((H, Fin), lambda i: (0, 0)),        # w1
                pl.BlockSpec((H, H), lambda i: (0, 0)),          # w2
                pl.BlockSpec((H, H), lambda i: (0, 0)),          # w3
                pl.BlockSpec((1, H), lambda i: (0, 0)),          # w4
                pl.BlockSpec((H, 3), lambda i: (0, 0)),          # b1|b2|b3
                pl.BlockSpec(memory_space=pltpu.MemorySpace.SMEM),  # b4 scalar
            ],
            out_specs=pl.BlockSpec((1, tile_b), lambda i: (0, i)),
        ),
        compiler_params=pltpu.CompilerParams(
            dimension_semantics=("parallel",)),
        cost_estimate=pl.CostEstimate(
            flops=flops, transcendentals=B, bytes_accessed=bytes_accessed),
    )(xt, w1, w2, w3, w4, b123, b4)

    return out_t.reshape(B, 1)


def init_params(key, hidden_dim):
    """PyTorch Linear default init (U[-1/sqrt(fan_in), 1/sqrt(fan_in)]).
    Weights kept in PyTorch's (out_features, in_features) layout."""
    ks = jax.random.split(key, 10)

    def lin(kw, kb, fan_in, fan_out):
        bound = 1.0 / jnp.sqrt(fan_in)
        w = jax.random.uniform(kw, (fan_out, fan_in), jnp.float32, -bound, bound)
        b = jax.random.uniform(kb, (fan_out,), jnp.float32, -bound, bound)
        return w, b

    w1, b1 = lin(ks[0], ks[1], 2, hidden_dim)
    w2, b2 = lin(ks[2], ks[3], hidden_dim, hidden_dim)
    w3, b3 = lin(ks[4], ks[5], hidden_dim, hidden_dim)
    w4, b4 = lin(ks[6], ks[7], hidden_dim, 1)

    # Unused in forward(): weight-norm projection Linear(2, 2, bias=False)
    # with weight_g filled with 1.  Kept only for parameter-shape fidelity.
    proj_v = jax.random.uniform(ks[8], (2, 2), jnp.float32,
                                -1.0 / jnp.sqrt(2.0), 1.0 / jnp.sqrt(2.0))
    proj_g = jnp.ones((2, 1), jnp.float32)

    return {"w1": w1, "b1": b1, "w2": w2, "b2": b2,
            "w3": w3, "b3": b3, "w4": w4, "b4": b4,
            "proj_v": proj_v, "proj_g": proj_g}


def reference_forward(x, params):
    h = jnp.maximum(x @ params["w1"].T + params["b1"], 0.0)
    h = jnp.maximum(h @ params["w2"].T + params["b2"], 0.0)
    h = jnp.maximum(h @ params["w3"].T + params["b3"], 0.0)
    return jax.nn.sigmoid(h @ params["w4"].T + params["b4"])


if __name__ == "__main__":
    key = jax.random.PRNGKey(0)
    k_x, k_p = jax.random.split(key)

    batch = 64
    hidden_dim = 32

    x = jax.random.normal(k_x, (batch, 2), jnp.float32)
    params = init_params(k_p, hidden_dim)

    out = discriminator_toy_forward(x, params)   # single grid step for B=64
    out = jax.block_until_ready(out)

    ref = reference_forward(x, params)
    assert out.shape == (batch, 1)
    assert jnp.allclose(out, ref, atol=1e-5, rtol=1e-5)

    print("KERNEL_OK")
</pallas_src>

<mosaic_0001>
module attributes {stable_mosaic.version = 11 : i64} {
  func.func @discriminator_kernel(%arg0: i32, %arg1: memref<2x64xf32, #tpu.memory_space<vmem>>, %arg2: memref<32x2xf32, #tpu.memory_space<vmem>>, %arg3: memref<32x32xf32, #tpu.memory_space<vmem>>, %arg4: memref<32x32xf32, #tpu.memory_space<vmem>>, %arg5: memref<1x32xf32, #tpu.memory_space<vmem>>, %arg6: memref<32x3xf32, #tpu.memory_space<vmem>>, %arg7: memref<1x1xf32, #tpu.memory_space<smem>>, %arg8: memref<1x64xf32, #tpu.memory_space<vmem>>) attributes {dimension_semantics = [#tpu.dimension_semantics<parallel>], iteration_bounds = array<i64: 1>, scalar_prefetch = 0 : i64, scratch_operands = 0 : i64, tpu.core_type = #tpu.core_type<tc>, window_params = [{transform_indices = @transform_0, window_bounds = array<i64: 2, 64>}, {pipeline_mode = #tpu.pipeline_mode<synchronous>, transform_indices = @transform_1, window_bounds = array<i64: 32, 2>}, {pipeline_mode = #tpu.pipeline_mode<synchronous>, transform_indices = @transform_2, window_bounds = array<i64: 32, 32>}, {pipeline_mode = #tpu.pipeline_mode<synchronous>, transform_indices = @transform_3, window_bounds = array<i64: 32, 32>}, {pipeline_mode = #tpu.pipeline_mode<synchronous>, transform_indices = @transform_4, window_bounds = array<i64: 1, 32>}, {pipeline_mode = #tpu.pipeline_mode<synchronous>, transform_indices = @transform_5, window_bounds = array<i64: 32, 3>}, {transform_indices = @transform_6, window_bounds = array<i64: 1, 1>}, {transform_indices = @transform_7, window_bounds = array<i64: 1, 64>}]} {
    %c0 = arith.constant 0 : index
    %c0_0 = arith.constant 0 : index
    %0 = vector.load %arg1[%c0, %c0_0] : memref<2x64xf32, #tpu.memory_space<vmem>>, vector<1x64xf32>
    %c1 = arith.constant 1 : index
    %c0_1 = arith.constant 0 : index
    %1 = vector.load %arg1[%c1, %c0_1] : memref<2x64xf32, #tpu.memory_space<vmem>>, vector<1x64xf32>
    %c0_2 = arith.constant 0 : index
    %c0_3 = arith.constant 0 : index
    %2 = vector.load %arg2[%c0_2, %c0_3] : memref<32x2xf32, #tpu.memory_space<vmem>>, vector<32x1xf32>
    %3 = vector.broadcast %2 : vector<32x1xf32> to vector<32x64xf32>
    %4 = vector.broadcast %0 : vector<1x64xf32> to vector<32x64xf32>
    %5 = arith.mulf %3, %4 : vector<32x64xf32>
    %c0_4 = arith.constant 0 : index
    %c1_5 = arith.constant 1 : index
    %6 = vector.load %arg2[%c0_4, %c1_5] : memref<32x2xf32, #tpu.memory_space<vmem>>, vector<32x1xf32>
    %7 = vector.broadcast %6 : vector<32x1xf32> to vector<32x64xf32>
    %8 = vector.broadcast %1 : vector<1x64xf32> to vector<32x64xf32>
    %9 = arith.mulf %7, %8 : vector<32x64xf32>
    %10 = arith.addf %5, %9 : vector<32x64xf32>
    %c0_6 = arith.constant 0 : index
    %c0_7 = arith.constant 0 : index
    %11 = vector.load %arg6[%c0_6, %c0_7] : memref<32x3xf32, #tpu.memory_space<vmem>>, vector<32x1xf32>
    %12 = vector.broadcast %11 : vector<32x1xf32> to vector<32x64xf32>
    %13 = arith.addf %10, %12 : vector<32x64xf32>
    %cst = arith.constant 0.000000e+00 : f32
    %14 = vector.broadcast %cst : f32 to vector<32x64xf32>
    %15 = arith.maximumf %13, %14 : vector<32x64xf32>
    %c0_8 = arith.constant 0 : index
    %c0_9 = arith.constant 0 : index
    %16 = vector.load %arg3[%c0_8, %c0_9] : memref<32x32xf32, #tpu.memory_space<vmem>>, vector<32x32xf32>
    %cst_10 = arith.constant dense<0.000000e+00> : vector<32x64xf32>
    %17 = tpu.matmul %16, %15, %cst_10 {dimension_numbers = #tpu.dot_dimension_numbers<[1], [0], [0], [1], [0, 0, 1, 1], [], []>} : vector<32x32xf32>, vector<32x64xf32>, vector<32x64xf32> -> vector<32x64xf32>
    %c0_11 = arith.constant 0 : index
    %c1_12 = arith.constant 1 : index
    %18 = vector.load %arg6[%c0_11, %c1_12] : memref<32x3xf32, #tpu.memory_space<vmem>>, vector<32x1xf32>
    %19 = vector.broadcast %18 : vector<32x1xf32> to vector<32x64xf32>
    %20 = arith.addf %17, %19 : vector<32x64xf32>
    %cst_13 = arith.constant 0.000000e+00 : f32
    %21 = vector.broadcast %cst_13 : f32 to vector<32x64xf32>
    %22 = arith.maximumf %20, %21 : vector<32x64xf32>
    %c0_14 = arith.constant 0 : index
    %c0_15 = arith.constant 0 : index
    %23 = vector.load %arg4[%c0_14, %c0_15] : memref<32x32xf32, #tpu.memory_space<vmem>>, vector<32x32xf32>
    %cst_16 = arith.constant dense<0.000000e+00> : vector<32x64xf32>
    %24 = tpu.matmul %23, %22, %cst_16 {dimension_numbers = #tpu.dot_dimension_numbers<[1], [0], [0], [1], [0, 0, 1, 1], [], []>} : vector<32x32xf32>, vector<32x64xf32>, vector<32x64xf32> -> vector<32x64xf32>
    %c0_17 = arith.constant 0 : index
    %c2 = arith.constant 2 : index
    %25 = vector.load %arg6[%c0_17, %c2] : memref<32x3xf32, #tpu.memory_space<vmem>>, vector<32x1xf32>
    %26 = vector.broadcast %25 : vector<32x1xf32> to vector<32x64xf32>
    %27 = arith.addf %24, %26 : vector<32x64xf32>
    %cst_18 = arith.constant 0.000000e+00 : f32
    %28 = vector.broadcast %cst_18 : f32 to vector<32x64xf32>
    %29 = arith.maximumf %27, %28 : vector<32x64xf32>
    %c0_19 = arith.constant 0 : index
    %c0_20 = arith.constant 0 : index
    %30 = vector.load %arg5[%c0_19, %c0_20] : memref<1x32xf32, #tpu.memory_space<vmem>>, vector<1x32xf32>
    %cst_21 = arith.constant dense<0.000000e+00> : vector<1x64xf32>
    %31 = tpu.matmul %30, %29, %cst_21 {dimension_numbers = #tpu.dot_dimension_numbers<[1], [0], [0], [1], [0, 0, 1, 1], [], []>} : vector<1x32xf32>, vector<32x64xf32>, vector<1x64xf32> -> vector<1x64xf32>
    %c0_22 = arith.constant 0 : index
    %c0_23 = arith.constant 0 : index
    %32 = memref.load %arg7[%c0_22, %c0_23] : memref<1x1xf32, #tpu.memory_space<smem>>
    %33 = vector.broadcast %32 : f32 to vector<1x64xf32>
    %34 = arith.addf %31, %33 : vector<1x64xf32>
    %cst_24 = arith.constant 5.000000e-01 : f32
    %35 = vector.broadcast %cst_24 : f32 to vector<1x64xf32>
    %36 = arith.mulf %35, %34 : vector<1x64xf32>
    %37 = math.tanh %36 : vector<1x64xf32>
    %cst_25 = arith.constant 5.000000e-01 : f32
    %38 = vector.broadcast %cst_25 : f32 to vector<1x64xf32>
    %39 = arith.mulf %38, %37 : vector<1x64xf32>
    %cst_26 = arith.constant 5.000000e-01 : f32
    %40 = vector.broadcast %cst_26 : f32 to vector<1x64xf32>
    %41 = arith.addf %39, %40 : vector<1x64xf32>
    %c0_27 = arith.constant 0 : index
    %c0_28 = arith.constant 0 : index
    %42 = vector.load %arg8[%c0_27, %c0_28] : memref<1x64xf32, #tpu.memory_space<vmem>>, vector<1x64xf32>
    tpu.vector_store %arg8[%c0_27, %c0_28], %41 {strides = array<i32>} : memref<1x64xf32, #tpu.memory_space<vmem>>, vector<1x64xf32>,
    return
  }
  func.func @transform_0(%arg0: i32) -> (i32, i32) {
    %c0_i32 = arith.constant 0 : i32
    %c0_i32_0 = arith.constant 0 : i32
    return %c0_i32, %arg0 : i32, i32
  }
  func.func @transform_1(%arg0: i32) -> (i32, i32) {
    %c0_i32 = arith.constant 0 : i32
    %c0_i32_0 = arith.constant 0 : i32
    %c0_i32_1 = arith.constant 0 : i32
    return %c0_i32, %c0_i32_0 : i32, i32
  }
  func.func @transform_2(%arg0: i32) -> (i32, i32) {
    %c0_i32 = arith.constant 0 : i32
    %c0_i32_0 = arith.constant 0 : i32
    %c0_i32_1 = arith.constant 0 : i32
    return %c0_i32, %c0_i32_0 : i32, i32
  }
  func.func @transform_3(%arg0: i32) -> (i32, i32) {
    %c0_i32 = arith.constant 0 : i32
    %c0_i32_0 = arith.constant 0 : i32
    %c0_i32_1 = arith.constant 0 : i32
    return %c0_i32, %c0_i32_0 : i32, i32
  }
  func.func @transform_4(%arg0: i32) -> (i32, i32) {
    %c0_i32 = arith.constant 0 : i32
    %c0_i32_0 = arith.constant 0 : i32
    %c0_i32_1 = arith.constant 0 : i32
    return %c0_i32, %c0_i32_0 : i32, i32
  }
  func.func @transform_5(%arg0: i32) -> (i32, i32) {
    %c0_i32 = arith.constant 0 : i32
    %c0_i32_0 = arith.constant 0 : i32
    %c0_i32_1 = arith.constant 0 : i32
    return %c0_i32, %c0_i32_0 : i32, i32
  }
  func.func @transform_6(%arg0: i32) -> (i32, i32) {
    %c0_i32 = arith.constant 0 : i32
    %c0_i32_0 = arith.constant 0 : i32
    %c0_i32_1 = arith.constant 0 : i32
    return %c0_i32, %c0_i32_0 : i32, i32
  }
  func.func @transform_7(%arg0: i32) -> (i32, i32) {
    %c0_i32 = arith.constant 0 : i32
    %c0_i32_0 = arith.constant 0 : i32
    return %c0_i32, %arg0 : i32, i32
  }
}

</mosaic_0001>

<llo_original>
// kernel: tpu_custom_call.1
$region0: #{tpu_custom_call.1}
  #allocation0 [shape = 'u32[]', space=smem, size = 0x4, offset = 0x4, fixed_abs, tag = 'smem constant byte address 0x4 - core index']
  #allocation1 [shape = 'u32[72,128]{1,0:T(1,128)}', space=vmem, size = 0x9000, scoped, tag = 'internal scratch']
  #allocation2 [shape = 'f32[1,1]{1,0:T(1,128)S(6)}', space=smem, size = 0x200, scoped, tag = 'scoped memory for tpu_custom_call.1']
  %s0 = inlined_call_operand.vmem [shape: f32[2,64], index: 0, kind: input, shape index: {}]
  %s1 = inlined_call_operand.vmem [shape: f32[32,2], index: 1, kind: input, shape index: {}]
  %s2 = inlined_call_operand.vmem [shape: f32[32,32], index: 2, kind: input, shape index: {}]
  %s3 = inlined_call_operand.vmem [shape: f32[32,32], index: 3, kind: input, shape index: {}]
  %s4 = inlined_call_operand.vmem [shape: f32[1,32], index: 4, kind: input, shape index: {}]
  %s5 = inlined_call_operand.vmem [shape: f32[32,3], index: 5, kind: input, shape index: {}]
  %s6 = inlined_call_operand.<no memory space> [shape: f32[1,1], index: 6, kind: input, shape index: {}]
  %s7 = inlined_call_operand.hbm [shape: f32[1,64], index: 7, kind: output, shape index: {}]
  %s8 = sld [smem:[#allocation0]]
  $region38: #{tpu_custom_call.1} parent=0
    _
  %s10 = ssub.s32 1, %s8
  %s11 = scalar_select 0, %s10, %s8
  %12 = sst [smem:[#allocation2]] %s6
  $region1: #{tpu_custom_call.1} parent=0
    #allocation3 [shape = 'u8[512]{0}', space=vmem, size = 0x400, scoped, tag = 'output window, operand 0, single buffered']
    #allocation4 [shape = 's32[1]{0}', space=sflag, size = 0x4, scoped, tag = 'scoped memory for tpu_custom_call.1']
    %13 = vsyncpa [#allocation4], 0
    // Predicated region
    $region2: #{tpu_custom_call.1} parent=1 // pred_check
      _
    $region3: #{tpu_custom_call.1} parent=1 // pred_check_branch
      %15 = sbr.rel (0) target = $region5
    $region4: #{tpu_custom_call.1} parent=1 // pred_region
      _
    $region5: #{tpu_custom_call.1} parent=1 // pred_fallthru
      _
    // Predicated region
    $region6: #{tpu_custom_call.1} parent=1 // pred_check
      _
    $region7: #{tpu_custom_call.1} parent=1 // pred_check_branch
      %17 = sbr.rel (0) target = $region9
    $region8: #{tpu_custom_call.1} parent=1 // pred_region
      _
    $region9: #{tpu_custom_call.1} parent=1 // pred_fallthru
      _
    // Predicated region
    $region10: #{tpu_custom_call.1} parent=1 // pred_check
      _
    $region11: #{tpu_custom_call.1} parent=1 // pred_check_branch
      %19 = sbr.rel (0) target = $region13
    $region12: #{tpu_custom_call.1} parent=1 // pred_region
      _
    $region13: #{tpu_custom_call.1} parent=1 // pred_fallthru
      _
    // Predicated region
    $region14: #{tpu_custom_call.1} parent=1 // pred_check
      _
    $region15: #{tpu_custom_call.1} parent=1 // pred_check_branch
      %21 = sbr.rel (0) target = $region17
    $region16: #{tpu_custom_call.1} parent=1 // pred_region
      _
    $region17: #{tpu_custom_call.1} parent=1 // pred_fallthru
      _
    // Predicated region
    $region18: #{tpu_custom_call.1} parent=1 // pred_check
      _
    $region19: #{tpu_custom_call.1} parent=1 // pred_check_branch
      %23 = sbr.rel (0) target = $region21
    $region20: #{tpu_custom_call.1} parent=1 // pred_region
      _
    $region21: #{tpu_custom_call.1} parent=1 // pred_fallthru
      _
    // Predicated region
    $region22: #{tpu_custom_call.1} parent=1 // pred_check
      _
    $region23: #{tpu_custom_call.1} parent=1 // pred_check_branch
      %25 = sbr.rel (0) target = $region25
    $region24: #{tpu_custom_call.1} parent=1 // pred_region
      _
    $region25: #{tpu_custom_call.1} parent=1 // pred_fallthru
      _
    // Predicated region
    $region26: #{tpu_custom_call.1} parent=1 // pred_check
      _
    $region27: #{tpu_custom_call.1} parent=1 // pred_check_branch
      %27 = sbr.rel (0) target = $region29
    $region28: #{tpu_custom_call.1} parent=1 // pred_region
      _
    $region29: #{tpu_custom_call.1} parent=1 // pred_fallthru
      _
    %v28 = vld [vmem:[%s0] sm:$0x1]
    %v29 = vld [vmem:[%s0 + $0x1] sm:$0x1]
    %v30 = vld [vmem:[%s1] sm:$0xff]
    %v31 = vld [vmem:[%s1 + $0x8] sm:$0xff]
    %v32 = vld [vmem:[%s1 + $0x10] sm:$0xff]
    %v33 = vld [vmem:[%s1 + $0x18] sm:$0xff]
    %35 = vset.pattern.permute.xlu0 0
    %36 = vperm.xlu0 %35, %v30
    %v37 = vpop.permute.xlu0 %36
    %40 = vset.pattern.permute.xlu0 0
    %41 = vperm.xlu0 %40, %v31
    %v42 = vpop.permute.xlu0 %41
    %45 = vset.pattern.permute.xlu0 0
    %46 = vperm.xlu0 %45, %v32
    %v47 = vpop.permute.xlu0 %46
    %50 = vset.pattern.permute.xlu0 0
    %51 = vperm.xlu0 %50, %v33
    %v52 = vpop.permute.xlu0 %51
    %v54 = vperm.slane %v28, 0
    %v55 = vmul.f32 %v37, %v54
    %v56 = vmul.f32 %v42, %v54
    %v57 = vmul.f32 %v47, %v54
    %v58 = vmul.f32 %v52, %v54
    %59 = vset.pattern.permute.xlu0 1
    %60 = vperm.xlu0 %59, %v30
    %v61 = vpop.permute.xlu0 %60
    %63 = vset.pattern.permute.xlu0 1
    %64 = vperm.xlu0 %63, %v31
    %v65 = vpop.permute.xlu0 %64
    %67 = vset.pattern.permute.xlu0 1
    %68 = vperm.xlu0 %67, %v32
    %v69 = vpop.permute.xlu0 %68
    %71 = vset.pattern.permute.xlu0 1
    %72 = vperm.xlu0 %71, %v33
    %v73 = vpop.permute.xlu0 %72
    %v75 = vperm.slane %v29, 0
    %v76 = vmul.f32 %v61, %v75
    %v77 = vmul.f32 %v65, %v75
    %v78 = vmul.f32 %v69, %v75
    %v79 = vmul.f32 %v73, %v75
    %v80 = vadd.f32 %v55, %v76
    %v81 = vadd.f32 %v56, %v77
    %v82 = vadd.f32 %v57, %v78
    %v83 = vadd.f32 %v58, %v79
    %v84 = vld [vmem:[%s5] sm:$0xff]
    %v85 = vld [vmem:[%s5 + $0x8] sm:$0xff]
    %v86 = vld [vmem:[%s5 + $0x10] sm:$0xff]
    %v87 = vld [vmem:[%s5 + $0x18] sm:$0xff]
    %89 = vset.pattern.permute.xlu0 0
    %90 = vperm.xlu0 %89, %v84
    %v91 = vpop.permute.xlu0 %90
    %94 = vset.pattern.permute.xlu0 0
    %95 = vperm.xlu0 %94, %v85
    %v96 = vpop.permute.xlu0 %95
    %99 = vset.pattern.permute.xlu0 0
    %100 = vperm.xlu0 %99, %v86
    %v101 = vpop.permute.xlu0 %100
    %104 = vset.pattern.permute.xlu0 0
    %105 = vperm.xlu0 %104, %v87
    %v106 = vpop.permute.xlu0 %105
    %v108 = vadd.f32 %v80, %v91
    %v109 = vadd.f32 %v81, %v96
    %v110 = vadd.f32 %v82, %v101
    %v111 = vadd.f32 %v83, %v106
    %v112 = vmax.f32 %v108, 0.0
    %v113 = vmax.f32 %v109, 0.0
    %v114 = vmax.f32 %v110, 0.0
    %v115 = vmax.f32 %v111, 0.0
    %v116 = vld [vmem:[%s2] sm:$0xff]
    %v117 = vld [vmem:[%s2 + $0x8] sm:$0xff]
    %v118 = vld [vmem:[%s2 + $0x10] sm:$0xff]
    %v119 = vld [vmem:[%s2 + $0x18] sm:$0xff]
    %120 = vset.pattern.permute.xlu0 1
    %121 = vperm.xlu0 %120, %v84
    %v122 = vpop.permute.xlu0 %121
    %124 = vset.pattern.permute.xlu0 1
    %125 = vperm.xlu0 %124, %v85
    %v126 = vpop.permute.xlu0 %125
    %128 = vset.pattern.permute.xlu0 1
    %129 = vperm.xlu0 %128, %v86
    %v130 = vpop.permute.xlu0 %129
    %132 = vset.pattern.permute.xlu0 1
    %133 = vperm.xlu0 %132, %v87
    %v134 = vpop.permute.xlu0 %133
    %vm136 = vcmask 261120
    %v138 = vsel %vm136, %v116, 0
    %v141 = vsel %vm136, %v117, 0
    %v144 = vsel %vm136, %v118, 0
    %v147 = vsel %vm136, %v119, 0
    %149 = vmatpush.msra.mxu0 0.0
    %150 = vmatpush.msra.mxu0 0.0
    %151 = vmatpush.msra.mxu0 0.0
    %152 = vmatpush.msra.mxu0 0.0
    %153 = vmatpush.msra.mxu0 0.0
    %154 = vmatpush.msra.mxu0 0.0
    %155 = vmatpush.msra.mxu0 0.0
    %156 = vmatpush.msra.mxu0 0.0
    %157 = vmatpush.msra.mxu0 0.0
    %158 = vmatpush.msra.mxu0 0.0
    %159 = vmatpush.msra.mxu0 0.0
    %160 = vmatpush.msra.mxu0 0.0
    %161 = vmatpush.msra.mxu0 %v115
    %162 = vmatpush.msra.mxu0 %v114
    %163 = vmatpush.msra.mxu0 %v113
    %164 = vmatpush.msra.mxu0 %v112
    %165 = vmatmul.f32.gmra.mxu0 %v138
    %v166 = vpop.f32.mrf.mxu0
    %v167 = vadd.f32 %v122, %v166
    %168 = vmatmul.f32.gmra.mxu0 %v141
    %v169 = vpop.f32.mrf.mxu0
    %v170 = vadd.f32 %v126, %v169
    %171 = vmatmul.f32.gmra.mxu0 %v144
    %v172 = vpop.f32.mrf.mxu0
    %v173 = vadd.f32 %v130, %v172
    %174 = vmatmul.f32.gmra.mxu0 %v147
    %v175 = vpop.f32.mrf.mxu0
    %v176 = vadd.f32 %v134, %v175
    %177 = vdwg.mxu0
    %v178 = vmax.f32 %v167, 0.0
    %v179 = vmax.f32 %v170, 0.0
    %v180 = vmax.f32 %v173, 0.0
    %v181 = vmax.f32 %v176, 0.0
    %v182 = vld [vmem:[%s3] sm:$0xff]
    %v183 = vld [vmem:[%s3 + $0x8] sm:$0xff]
    %v184 = vld [vmem:[%s3 + $0x10] sm:$0xff]
    %v185 = vld [vmem:[%s3 + $0x18] sm:$0xff]
    %186 = vset.pattern.permute.xlu0 2
    %187 = vperm.xlu0 %186, %v84
    %v188 = vpop.permute.xlu0 %187
    %190 = vset.pattern.permute.xlu0 2
    %191 = vperm.xlu0 %190, %v85
    %v192 = vpop.permute.xlu0 %191
    %194 = vset.pattern.permute.xlu0 2
    %195 = vperm.xlu0 %194, %v86
    %v196 = vpop.permute.xlu0 %195
    %198 = vset.pattern.permute.xlu0 2
    %199 = vperm.xlu0 %198, %v87
    %v200 = vpop.permute.xlu0 %199
    %v203 = vsel %vm136, %v182, 0
    %v206 = vsel %vm136, %v183, 0
    %v209 = vsel %vm136, %v184, 0
    %v212 = vsel %vm136, %v185, 0
    %214 = vmatpush.msra.mxu0 0.0
    %215 = vmatpush.msra.mxu0 0.0
    %216 = vmatpush.msra.mxu0 0.0
    %217 = vmatpush.msra.mxu0 0.0
    %218 = vmatpush.msra.mxu0 0.0
    %219 = vmatpush.msra.mxu0 0.0
    %220 = vmatpush.msra.mxu0 0.0
    %221 = vmatpush.msra.mxu0 0.0
    %222 = vmatpush.msra.mxu0 0.0
    %223 = vmatpush.msra.mxu0 0.0
    %224 = vmatpush.msra.mxu0 0.0
    %225 = vmatpush.msra.mxu0 0.0
    %226 = vmatpush.msra.mxu0 %v181
    %227 = vmatpush.msra.mxu0 %v180
    %228 = vmatpush.msra.mxu0 %v179
    %229 = vmatpush.msra.mxu0 %v178
    %230 = vmatmul.f32.gmra.mxu0 %v203
    %v231 = vpop.f32.mrf.mxu0
    %v232 = vadd.f32 %v188, %v231
    %233 = vmatmul.f32.gmra.mxu0 %v206
    %v234 = vpop.f32.mrf.mxu0
    %v235 = vadd.f32 %v192, %v234
    %236 = vmatmul.f32.gmra.mxu0 %v209
    %v237 = vpop.f32.mrf.mxu0
    %v238 = vadd.f32 %v196, %v237
    %239 = vmatmul.f32.gmra.mxu0 %v212
    %v240 = vpop.f32.mrf.mxu0
    %v241 = vadd.f32 %v200, %v240
    %242 = vdwg.mxu0
    %v243 = vmax.f32 %v232, 0.0
    %v244 = vmax.f32 %v235, 0.0
    %v245 = vmax.f32 %v238, 0.0
    %v246 = vmax.f32 %v241, 0.0
    %v247 = vld [vmem:[%s4] sm:$0x1]
    %s248 = sld [smem:[#allocation2]]
    %v249 = vstv %s248
    %v251 = vsel %vm136, %v247, 0
    %253 = vmatpush.msra.mxu0 0.0
    %254 = vmatpush.msra.mxu0 0.0
    %255 = vmatpush.msra.mxu0 0.0
    %256 = vmatpush.msra.mxu0 0.0
    %257 = vmatpush.msra.mxu0 0.0
    %258 = vmatpush.msra.mxu0 0.0
    %259 = vmatpush.msra.mxu0 0.0
    %260 = vmatpush.msra.mxu0 0.0
    %261 = vmatpush.msra.mxu0 0.0
    %262 = vmatpush.msra.mxu0 0.0
    %263 = vmatpush.msra.mxu0 0.0
    %264 = vmatpush.msra.mxu0 0.0
    %265 = vmatpush.msra.mxu0 %v246
    %266 = vmatpush.msra.mxu0 %v245
    %267 = vmatpush.msra.mxu0 %v244
    %268 = vmatpush.msra.mxu0 %v243
    %269 = vmatmul.f32.gmra.mxu0 %v251
    %v270 = vpop.f32.mrf.mxu0
    %v271 = vadd.f32 %v249, %v270
    %272 = vdwg.mxu0
    %v273 = vmul.f32 %v271, 0.5
    %v274 = vtanh.pop %v273
    %v275 = vmul.f32 %v274, 0.5
    %v276 = vadd.f32 %v275, 0.5
    %vm277 = vcmask 516096
    %278 = vst.msk [vmem:[#allocation3] sm:$0x1] %vm277, %v276
    // Predicated region
    $region30: #{tpu_custom_call.1} parent=1 // pred_check
      _
    $region31: #{tpu_custom_call.1} parent=1 // pred_check_branch
      %280 = sbr.rel (0) target = $region33
    $region32: #{tpu_custom_call.1} parent=1 // pred_region
      %282 = vsyncadd [#allocation4], 0
      %s284 = sshll.u32 [#allocation3], 4
      %s285 = int_to_ptr.vmem [resolvable:$true] %s284
      %s286 = sshll.u32 %s7, 4
      %s287 = int_to_ptr.hbm [resolvable:$true] %s286
      %289 = dma.vmem_to_hbm [thread:$0]  %s285, 16, %s287, [#allocation4]
    $region33: #{tpu_custom_call.1} parent=1 // pred_fallthru
      _
    // Predicated region
    $region34: #{tpu_custom_call.1} parent=1 // pred_check
      _
    $region35: #{tpu_custom_call.1} parent=1 // pred_check_branch
      %291 = sbr.rel (0) target = $region37
    $region36: #{tpu_custom_call.1} parent=1 // pred_region
      %293 = dma.done [#allocation4], 16
    $region37: #{tpu_custom_call.1} parent=1 // pred_fallthru
      _
    %294 = vsyncpa [#allocation4], 1

</llo_original>
